<compile_context>
chip_gen: v6e
topology: v6e:2x2x1
jax: 0.10.0
libtpu: 0.0.40
codegen_flags: <defaults>
</compile_context>

<pallas_src>
import functools

import jax
import jax.numpy as jnp
from jax.experimental import pallas as pl
from jax.experimental.pallas import tpu as pltpu


def _mhai_kernel(head_num, Bt, F_, x_ref, w_ref, out_ref):
    rows, E_ = x_ref.shape          # rows == Bt * F_
    d = E_ // head_num              # attention head size
    scale = 1.0 / (float(d) ** 0.5)

    # ---- fused Q/K/V/R projection: one GEMM, batch folded into M ----
    # (Bt*F, E) @ (E, 4E) -> (Bt*F, 4E)
    proj = jnp.dot(x_ref[...], w_ref[...], preferred_element_type=jnp.float32)
    # split leading dim only (lane dim preserved -> cheap reshape)
    proj3 = proj.reshape(Bt, F_, 4 * E_)

    r3 = proj3[:, :, 3 * E_:4 * E_]                                      # (Bt, F, E) residual

    # ---- multi-head interaction, batched over the whole Bt-sample tile ----
    head_outs = []
    for h in range(head_num):                                            # small static loop
        qh = proj3[:, :, h * d:(h + 1) * d] * scale                      # (Bt, F, d)
        kh = proj3[:, :, E_ + h * d:E_ + (h + 1) * d]
        vh = proj3[:, :, 2 * E_ + h * d:2 * E_ + (h + 1) * d]
        s = jnp.einsum('bqd,bkd->bqk', qh, kh,
                       preferred_element_type=jnp.float32)               # (Bt, F, F)
        s = s - jnp.max(s, axis=-1, keepdims=True)
        p = jnp.exp(s)
        p = p / jnp.sum(p, axis=-1, keepdims=True)                       # softmax
        # TODO(synk): F.dropout on the attention weights is stochastic; treated
        # as an inference-time no-op here.
        oh = jnp.einsum('bqk,bkd->bqd', p, vh,
                        preferred_element_type=jnp.float32)              # (Bt, F, d)
        head_outs.append(oh)

    attn3 = jnp.concatenate(head_outs, axis=-1)                          # (Bt, F, E), head-major

    # ---- residual add + ReLU, stored once for the whole tile ----
    out_ref[...] = jnp.maximum(attn3 + r3, 0.0)


def multi_head_attention_interact(x, params, head_num, block_b=256):
    """x: (batch, field_dim, embed_size) -> (batch, field_dim, embed_size)."""
    b, F_, E_ = x.shape
    assert E_ % head_num == 0

    # Batch tile: as large as reasonable; keep the (Bt*F, E) input block
    # sublane-divisible when grid > 1.
    Bt = min(block_b, b)
    while (Bt * F_) % 8 != 0:
        Bt += 1
    bp = ((b + Bt - 1) // Bt) * Bt
    if bp != b:
        x = jnp.concatenate(
            [x, jnp.zeros((bp - b, F_, E_), x.dtype)], axis=0)

    x2d = x.astype(jnp.float32).reshape(bp * F_, E_)   # free row-major reshape in XLA
    # Fuse the four projection weights into one (E, 4E) matrix (tiny concat).
    w_all = jnp.concatenate(
        [params["wq"].astype(jnp.float32),
         params["wk"].astype(jnp.float32),
         params["wv"].astype(jnp.float32),
         params["wr"].astype(jnp.float32)], axis=1)    # (E, 4E)

    rows_per_block = Bt * F_
    grid = (bp // Bt,)

    kernel = functools.partial(_mhai_kernel, head_num, Bt, F_)

    grid_spec = pltpu.PrefetchScalarGridSpec(
        num_scalar_prefetch=0,
        grid=grid,
        in_specs=[
            pl.BlockSpec((rows_per_block, E_), lambda i: (i, 0)),   # x (Bt samples, flat)
            pl.BlockSpec((E_, 4 * E_), lambda i: (0, 0)),           # fused W_Q|W_K|W_V|W_R
        ],
        out_specs=pl.BlockSpec((Bt, F_, E_), lambda i: (i, 0, 0)),  # (Bt, F, E) block
    )

    out = pl.pallas_call(
        kernel,
        out_shape=jax.ShapeDtypeStruct((bp, F_, E_), jnp.float32),
        grid_spec=grid_spec,
        compiler_params=pltpu.CompilerParams(
            dimension_semantics=("parallel",)),    # batch tiles shard across TCs
    )(x2d, w_all)

    return out[:b]


# ----------------------------- reference & params -----------------------------

def _xavier_uniform(key, shape):
    fan_in, fan_out = shape
    a = (6.0 / (fan_in + fan_out)) ** 0.5
    return jax.random.uniform(key, shape, jnp.float32, -a, a)


def make_params(embed_size, seed=0):
    keys = jax.random.split(jax.random.PRNGKey(seed), 4)
    return {
        "wq": _xavier_uniform(keys[0], (embed_size, embed_size)),
        "wk": _xavier_uniform(keys[1], (embed_size, embed_size)),
        "wv": _xavier_uniform(keys[2], (embed_size, embed_size)),
        "wr": _xavier_uniform(keys[3], (embed_size, embed_size)),
    }


def mhai_reference(x, params, head_num):
    """Pure-JAX replica of the PyTorch forward (dropout = identity)."""
    B, F_, E_ = x.shape
    d = E_ // head_num
    hp = jax.lax.Precision.HIGHEST
    q = jnp.einsum('bfe,eg->bfg', x, params["wq"], precision=hp)
    k = jnp.einsum('bfe,eg->bfg', x, params["wk"], precision=hp)
    v = jnp.einsum('bfe,eg->bfg', x, params["wv"], precision=hp)
    r = jnp.einsum('bfe,eg->bfg', x, params["wr"], precision=hp)
    qh = q.reshape(B, F_, head_num, d)
    kh = k.reshape(B, F_, head_num, d)
    vh = v.reshape(B, F_, head_num, d)
    s = jnp.einsum('bqhd,bkhd->bhqk', qh, kh, precision=hp) / (d ** 0.5)
    p = jax.nn.softmax(s, axis=-1)
    o = jnp.einsum('bhqk,bkhd->bqhd', p, vh, precision=hp).reshape(B, F_, E_)
    return jnp.maximum(o + r, 0.0)


if __name__ == "__main__":
    BATCH, FIELD_DIM, EMBED_SIZE, HEAD_NUM = 2, 8, 16, 2

    params = make_params(EMBED_SIZE, seed=0)
    x = jax.random.normal(jax.random.PRNGKey(0),
                          (BATCH, FIELD_DIM, EMBED_SIZE), jnp.float32)

    out = jax.block_until_ready(
        multi_head_attention_interact(x, params, HEAD_NUM))
    assert out.shape == (BATCH, FIELD_DIM, EMBED_SIZE)
    assert bool(jnp.all(jnp.isfinite(out)))
    ref = mhai_reference(x, params, HEAD_NUM)
    assert bool(jnp.allclose(out, ref, atol=1e-3, rtol=1e-3))

    # exercise the batch-tiled (grid > 1) + padding path
    xb = jax.random.normal(jax.random.PRNGKey(1),
                           (300, FIELD_DIM, EMBED_SIZE), jnp.float32)
    outb = jax.block_until_ready(
        multi_head_attention_interact(xb, params, HEAD_NUM, block_b=128))
    refb = mhai_reference(xb, params, HEAD_NUM)
    assert outb.shape == (300, FIELD_DIM, EMBED_SIZE)
    assert bool(jnp.allclose(outb, refb, atol=1e-3, rtol=1e-3))

    print("KERNEL_OK")
</pallas_src>

<mosaic_0001>
module attributes {stable_mosaic.version = 11 : i64} {
  func.func @_mhai_kernel(%arg0: i32, %arg1: memref<16x16xf32, #tpu.memory_space<vmem>>, %arg2: memref<16x64xf32, #tpu.memory_space<vmem>>, %arg3: memref<2x8x16xf32, #tpu.memory_space<vmem>>) attributes {dimension_semantics = [#tpu.dimension_semantics<parallel>], iteration_bounds = array<i64: 1>, scalar_prefetch = 0 : i64, scratch_operands = 0 : i64, tpu.core_type = #tpu.core_type<tc>, window_params = [{transform_indices = @transform_0, window_bounds = array<i64: 16, 16>}, {pipeline_mode = #tpu.pipeline_mode<synchronous>, transform_indices = @transform_1, window_bounds = array<i64: 16, 64>}, {transform_indices = @transform_2, window_bounds = array<i64: 2, 8, 16>}]} {
    %c0 = arith.constant 0 : index
    %c0_0 = arith.constant 0 : index
    %0 = vector.load %arg1[%c0, %c0_0] : memref<16x16xf32, #tpu.memory_space<vmem>>, vector<16x16xf32>
    %c0_1 = arith.constant 0 : index
    %c0_2 = arith.constant 0 : index
    %1 = vector.load %arg2[%c0_1, %c0_2] : memref<16x64xf32, #tpu.memory_space<vmem>>, vector<16x64xf32>
    %cst = arith.constant dense<0.000000e+00> : vector<16x64xf32>
    %2 = tpu.matmul %0, %1, %cst {dimension_numbers = #tpu.dot_dimension_numbers<[1], [0], [0], [1], [0, 0, 1, 1], [], []>} : vector<16x16xf32>, vector<16x64xf32>, vector<16x64xf32> -> vector<16x64xf32>
    %3 = vector.shape_cast %2 : vector<16x64xf32> to vector<2x8x64xf32>
    %4 = vector.extract_strided_slice %3 {offsets = [0, 0, 48], sizes = [2, 8, 16], strides = [1, 1, 1]} : vector<2x8x64xf32> to vector<2x8x16xf32>
    %5 = vector.extract_strided_slice %3 {offsets = [0, 0, 0], sizes = [2, 8, 8], strides = [1, 1, 1]} : vector<2x8x64xf32> to vector<2x8x8xf32>
    %cst_3 = arith.constant 0.353553385 : f32
    %6 = vector.broadcast %cst_3 : f32 to vector<2x8x8xf32>
    %7 = arith.mulf %5, %6 : vector<2x8x8xf32>
    %8 = vector.extract_strided_slice %3 {offsets = [0, 0, 16], sizes = [2, 8, 8], strides = [1, 1, 1]} : vector<2x8x64xf32> to vector<2x8x8xf32>
    %9 = vector.extract_strided_slice %3 {offsets = [0, 0, 32], sizes = [2, 8, 8], strides = [1, 1, 1]} : vector<2x8x64xf32> to vector<2x8x8xf32>
    "tpu.trace_start"() <{level = 10 : i32, message = "bqd,bkd->bqk"}> : () -> ()
    %cst_4 = arith.constant dense<0.000000e+00> : vector<2x8x8xf32>
    %10 = tpu.matmul %7, %8, %cst_4 {dimension_numbers = #tpu.dot_dimension_numbers<[2], [2], [1], [1], [0, 0, 0, 1, 1, 1], [0], [0]>} : vector<2x8x8xf32>, vector<2x8x8xf32>, vector<2x8x8xf32> -> vector<2x8x8xf32>
    "tpu.trace_stop"() : () -> ()
    %cst_5 = arith.constant dense<0xFF800000> : vector<2x8xf32>
    %11 = vector.multi_reduction <maximumf>, %10, %cst_5 [2] : vector<2x8x8xf32> to vector<2x8xf32>
    %12 = vector.shape_cast %11 : vector<2x8xf32> to vector<2x8x1xf32>
    %13 = vector.broadcast %12 : vector<2x8x1xf32> to vector<2x8x8xf32>
    %14 = arith.subf %10, %13 : vector<2x8x8xf32>
    %15 = math.exp %14 : vector<2x8x8xf32>
    %cst_6 = arith.constant dense<0.000000e+00> : vector<2x8xf32>
    %16 = vector.multi_reduction <add>, %15, %cst_6 [2] : vector<2x8x8xf32> to vector<2x8xf32>
    %17 = vector.shape_cast %16 : vector<2x8xf32> to vector<2x8x1xf32>
    %18 = vector.broadcast %17 : vector<2x8x1xf32> to vector<2x8x8xf32>
    %19 = arith.divf %15, %18 : vector<2x8x8xf32>
    "tpu.trace_start"() <{level = 10 : i32, message = "bqk,bkd->bqd"}> : () -> ()
    %cst_7 = arith.constant dense<0.000000e+00> : vector<2x8x8xf32>
    %20 = tpu.matmul %19, %9, %cst_7 {dimension_numbers = #tpu.dot_dimension_numbers<[2], [1], [1], [2], [0, 0, 0, 1, 1, 2], [0], [0]>} : vector<2x8x8xf32>, vector<2x8x8xf32>, vector<2x8x8xf32> -> vector<2x8x8xf32>
    "tpu.trace_stop"() : () -> ()
    %21 = vector.extract_strided_slice %3 {offsets = [0, 0, 8], sizes = [2, 8, 8], strides = [1, 1, 1]} : vector<2x8x64xf32> to vector<2x8x8xf32>
    %cst_8 = arith.constant 0.353553385 : f32
    %22 = vector.broadcast %cst_8 : f32 to vector<2x8x8xf32>
    %23 = arith.mulf %21, %22 : vector<2x8x8xf32>
    %24 = vector.extract_strided_slice %3 {offsets = [0, 0, 24], sizes = [2, 8, 8], strides = [1, 1, 1]} : vector<2x8x64xf32> to vector<2x8x8xf32>
    %25 = vector.extract_strided_slice %3 {offsets = [0, 0, 40], sizes = [2, 8, 8], strides = [1, 1, 1]} : vector<2x8x64xf32> to vector<2x8x8xf32>
    "tpu.trace_start"() <{level = 10 : i32, message = "bqd,bkd->bqk"}> : () -> ()
    %cst_9 = arith.constant dense<0.000000e+00> : vector<2x8x8xf32>
    %26 = tpu.matmul %23, %24, %cst_9 {dimension_numbers = #tpu.dot_dimension_numbers<[2], [2], [1], [1], [0, 0, 0, 1, 1, 1], [0], [0]>} : vector<2x8x8xf32>, vector<2x8x8xf32>, vector<2x8x8xf32> -> vector<2x8x8xf32>
    "tpu.trace_stop"() : () -> ()
    %cst_10 = arith.constant dense<0xFF800000> : vector<2x8xf32>
    %27 = vector.multi_reduction <maximumf>, %26, %cst_10 [2] : vector<2x8x8xf32> to vector<2x8xf32>
    %28 = vector.shape_cast %27 : vector<2x8xf32> to vector<2x8x1xf32>
    %29 = vector.broadcast %28 : vector<2x8x1xf32> to vector<2x8x8xf32>
    %30 = arith.subf %26, %29 : vector<2x8x8xf32>
    %31 = math.exp %30 : vector<2x8x8xf32>
    %cst_11 = arith.constant dense<0.000000e+00> : vector<2x8xf32>
    %32 = vector.multi_reduction <add>, %31, %cst_11 [2] : vector<2x8x8xf32> to vector<2x8xf32>
    %33 = vector.shape_cast %32 : vector<2x8xf32> to vector<2x8x1xf32>
    %34 = vector.broadcast %33 : vector<2x8x1xf32> to vector<2x8x8xf32>
    %35 = arith.divf %31, %34 : vector<2x8x8xf32>
    "tpu.trace_start"() <{level = 10 : i32, message = "bqk,bkd->bqd"}> : () -> ()
    %cst_12 = arith.constant dense<0.000000e+00> : vector<2x8x8xf32>
    %36 = tpu.matmul %35, %25, %cst_12 {dimension_numbers = #tpu.dot_dimension_numbers<[2], [1], [1], [2], [0, 0, 0, 1, 1, 2], [0], [0]>} : vector<2x8x8xf32>, vector<2x8x8xf32>, vector<2x8x8xf32> -> vector<2x8x8xf32>
    "tpu.trace_stop"() : () -> ()
    %37 = tpu.concatenate %20, %36 in 2 : vector<2x8x8xf32>, vector<2x8x8xf32> -> vector<2x8x16xf32>
    %38 = arith.addf %37, %4 : vector<2x8x16xf32>
    %cst_13 = arith.constant 0.000000e+00 : f32
    %39 = vector.broadcast %cst_13 : f32 to vector<2x8x16xf32>
    %40 = arith.maximumf %38, %39 : vector<2x8x16xf32>
    %c0_14 = arith.constant 0 : index
    %c0_15 = arith.constant 0 : index
    %c0_16 = arith.constant 0 : index
    %41 = vector.load %arg3[%c0_14, %c0_15, %c0_16] : memref<2x8x16xf32, #tpu.memory_space<vmem>>, vector<2x8x16xf32>
    tpu.vector_store %arg3[%c0_14, %c0_15, %c0_16], %40 {strides = array<i32>} : memref<2x8x16xf32, #tpu.memory_space<vmem>>, vector<2x8x16xf32>,
    return
  }
  func.func @transform_0(%arg0: i32) -> (i32, i32) {
    %c0_i32 = arith.constant 0 : i32
    %c0_i32_0 = arith.constant 0 : i32
    return %arg0, %c0_i32 : i32, i32
  }
  func.func @transform_1(%arg0: i32) -> (i32, i32) {
    %c0_i32 = arith.constant 0 : i32
    %c0_i32_0 = arith.constant 0 : i32
    %c0_i32_1 = arith.constant 0 : i32
    return %c0_i32, %c0_i32_0 : i32, i32
  }
  func.func @transform_2(%arg0: i32) -> (i32, i32, i32) {
    %c0_i32 = arith.constant 0 : i32
    %c0_i32_0 = arith.constant 0 : i32
    %c0_i32_1 = arith.constant 0 : i32
    return %arg0, %c0_i32, %c0_i32_0 : i32, i32, i32
  }
}

</mosaic_0001>

<llo_original>
// kernel: tpu_custom_call.1
$region0: #{tpu_custom_call.1}
  #allocation0 [shape = 'u32[]', space=smem, size = 0x4, offset = 0x4, fixed_abs, tag = 'smem constant byte address 0x4 - core index']
  #allocation1 [shape = 'u32[144,128]{1,0:T(1,128)}', space=vmem, size = 0x12000, scoped, tag = 'internal scratch']
  %s0 = inlined_call_operand.hbm [shape: f32[16,16], index: 0, kind: input, shape index: {}]
  %s1 = inlined_call_operand.hbm [shape: f32[16,64], index: 1, kind: input, shape index: {}]
  %s2 = inlined_call_operand.hbm [shape: f32[2,8,16], index: 2, kind: output, shape index: {}]
  %s3 = sld [smem:[#allocation0]]
  $region26: #{tpu_custom_call.1} parent=0
    _
  %s5 = ssub.s32 1, %s3
  %s6 = scalar_select 0, %s5, %s3
  $region1: #{tpu_custom_call.1} parent=0
    #allocation2 [shape = 'u8[8192]{0}', space=vmem, size = 0x2000, scoped, tag = 'input window, operand 0, single buffered']
    #allocation3 [shape = 's32[1]{0}', space=sflag, size = 0x4, scoped, tag = 'scoped memory for tpu_custom_call.1']
    #allocation4 [shape = 's32[1]{0}', space=sflag, size = 0x4, scoped, tag = 'scoped memory for tpu_custom_call.1']
    #allocation5 [shape = 'u8[8192]{0}', space=vmem, size = 0x2000, scoped, tag = 'input window, operand 1, single buffered']
    #allocation6 [shape = 's32[1]{0}', space=sflag, size = 0x4, scoped, tag = 'scoped memory for tpu_custom_call.1']
    #allocation7 [shape = 'u8[8192]{0}', space=vmem, size = 0x2000, scoped, tag = 'output window, operand 0, single buffered']
    %7 = vsyncpa [#allocation3], 0
    %8 = vsyncpa [#allocation6], 0
    %9 = vsyncpa [#allocation4], 0
    // Predicated region
    $region2: #{tpu_custom_call.1} parent=1 // pred_check
      _
    $region3: #{tpu_custom_call.1} parent=1 // pred_check_branch
      %11 = sbr.rel (0) target = $region5
    $region4: #{tpu_custom_call.1} parent=1 // pred_region
      %s13 = ssub.s32 256, 256
      %14 = vsyncadd [#allocation3], %s13
      %s15 = sshll.u32 [#allocation2], 4
      %s16 = int_to_ptr.vmem [resolvable:$true] %s15
      %21 = dma.hbm_to_vmem [thread:$0]  %s0, 256, %s16, [#allocation3], 128, 128, 8
    $region5: #{tpu_custom_call.1} parent=1 // pred_fallthru
      _
    // Predicated region
    $region6: #{tpu_custom_call.1} parent=1 // pred_check
      _
    $region7: #{tpu_custom_call.1} parent=1 // pred_check_branch
      %23 = sbr.rel (0) target = $region9
    $region8: #{tpu_custom_call.1} parent=1 // pred_region
      %s25 = ssub.s32 256, 256
      %26 = vsyncadd [#allocation6], %s25
      %s27 = sshll.u32 [#allocation5], 4
      %s28 = int_to_ptr.vmem [resolvable:$true] %s27
      %33 = dma.hbm_to_vmem [thread:$0]  %s1, 256, %s28, [#allocation6], 128, 128, 8
    $region9: #{tpu_custom_call.1} parent=1 // pred_fallthru
      _
    // Predicated region
    $region10: #{tpu_custom_call.1} parent=1 // pred_check
      _
    $region11: #{tpu_custom_call.1} parent=1 // pred_check_branch
      %35 = sbr.rel (0) target = $region13
    $region12: #{tpu_custom_call.1} parent=1 // pred_region
      %36 = dma.done [#allocation3], 256
    $region13: #{tpu_custom_call.1} parent=1 // pred_fallthru
      _
    // Predicated region
    $region14: #{tpu_custom_call.1} parent=1 // pred_check
      _
    $region15: #{tpu_custom_call.1} parent=1 // pred_check_branch
      %38 = sbr.rel (0) target = $region17
    $region16: #{tpu_custom_call.1} parent=1 // pred_region
      %39 = dma.done [#allocation6], 256
    $region17: #{tpu_custom_call.1} parent=1 // pred_fallthru
      _
    %v40 = vld [vmem:[#allocation2] sm:$0xff]
    %v41 = vld [vmem:[#allocation2 + $0x8] sm:$0xff]
    %v42 = vld [vmem:[#allocation5] sm:$0xff]
    %v43 = vld [vmem:[#allocation5 + $0x8] sm:$0xff]
    %vm44 = vcmask 130048
    %v46 = vsel %vm44, %v40, 0
    %v49 = vsel %vm44, %v41, 0
    %51 = vmatprep.subr.mxu0 0.0
    %52 = vmatpush1.msra.mxu0 0.0
    %53 = vmatprep.subr.mxu0 0.0
    %54 = vmatpush1.msra.mxu0 0.0
    %55 = vmatprep.subr.mxu0 0.0
    %56 = vmatpush1.msra.mxu0 0.0
    %57 = vmatprep.subr.mxu0 0.0
    %58 = vmatpush1.msra.mxu0 0.0
    %59 = vmatprep.subr.mxu0 0.0
    %60 = vmatpush1.msra.mxu0 0.0
    %61 = vmatprep.subr.mxu0 0.0
    %62 = vmatpush1.msra.mxu0 0.0
    %63 = vmatprep.subr.mxu0 0.0
    %64 = vmatpush1.msra.mxu0 0.0
    %65 = vmatprep.subr.mxu0 0.0
    %66 = vmatpush1.msra.mxu0 0.0
    %67 = vmatprep.subr.mxu0 0.0
    %68 = vmatpush1.msra.mxu0 0.0
    %69 = vmatprep.subr.mxu0 0.0
    %70 = vmatpush1.msra.mxu0 0.0
    %71 = vmatprep.subr.mxu0 0.0
    %72 = vmatpush1.msra.mxu0 0.0
    %73 = vmatprep.subr.mxu0 0.0
    %74 = vmatpush1.msra.mxu0 0.0
    %75 = vmatprep.subr.mxu0 0.0
    %76 = vmatpush1.msra.mxu0 0.0
    %77 = vmatprep.subr.mxu0 0.0
    %78 = vmatpush1.msra.mxu0 0.0
    %79 = vmatprep.subr.mxu0 0.0
    %80 = vmatpush1.msra.mxu0 %v43
    %81 = vmatprep.subr.mxu0 0.0
    %82 = vmatpush1.msra.mxu0 %v42
    %83 = vmatprep.subr.mxu0 0.0
    %84 = vmatpush2.msra.mxu0 0.0
    %85 = vmatprep.subr.mxu0 0.0
    %86 = vmatpush2.msra.mxu0 0.0
    %87 = vmatprep.subr.mxu0 0.0
    %88 = vmatpush2.msra.mxu0 0.0
    %89 = vmatprep.subr.mxu0 0.0
    %90 = vmatpush2.msra.mxu0 0.0
    %91 = vmatprep.subr.mxu0 0.0
    %92 = vmatpush2.msra.mxu0 0.0
    %93 = vmatprep.subr.mxu0 0.0
    %94 = vmatpush2.msra.mxu0 0.0
    %95 = vmatprep.subr.mxu0 0.0
    %96 = vmatpush2.msra.mxu0 0.0
    %97 = vmatprep.subr.mxu0 0.0
    %98 = vmatpush2.msra.mxu0 0.0
    %99 = vmatprep.subr.mxu0 0.0
    %100 = vmatpush2.msra.mxu0 0.0
    %101 = vmatprep.subr.mxu0 0.0
    %102 = vmatpush2.msra.mxu0 0.0
    %103 = vmatprep.subr.mxu0 0.0
    %104 = vmatpush2.msra.mxu0 0.0
    %105 = vmatprep.subr.mxu0 0.0
    %106 = vmatpush2.msra.mxu0 0.0
    %107 = vmatprep.subr.mxu0 0.0
    %108 = vmatpush2.msra.mxu0 0.0
    %109 = vmatprep.subr.mxu0 0.0
    %110 = vmatpush2.msra.mxu0 0.0
    %111 = vmatprep.subr.mxu0 0.0
    %112 = vmatpush2.msra.mxu0 0.0
    %113 = vmatprep.subr.mxu0 0.0
    %114 = vmatpush2.msra.mxu0 0.0
    %115 = vmatprep.mubr.f32.mxu0 0.0
    %116 = vmatmul.mubr.f32.gmra.mxu0 %v46
    %v117 = vpop.f32.mrf.mxu0
    %v118 = vadd.f32 0.0, %v117
    %v119 = vpop.f32.mrf.mxu0
    %120 = vmatprep.mubr.f32.mxu0 0.0
    %121 = vmatmul.mubr.f32.gmra.mxu0 %v49
    %v122 = vpop.f32.mrf.mxu0
    %v123 = vadd.f32 0.0, %v122
    %v124 = vpop.f32.mrf.mxu0
    %125 = vdwg.mxu0
    %v126 = vmul.f32 %v118, 0.35355338
    %v127 = vmul.f32 %v123, 0.35355338
    %129 = vrot.lane.b32.xlu0 %v118, 112
    %v130 = vpop.permute.xlu0 %129
    %vm131 = vcmask 64512
    %v133 = vsel %vm131, %v126, 0
    %v135 = vsel %vm131, %v130, 0
    %137 = vmatprep.subr.mxu0 0.0
    %138 = vmatpush1.xpose.msra.mxu0 0.0
    %139 = vmatprep.subr.mxu0 0.0
    %140 = vmatpush1.xpose.msra.mxu0 0.0
    %141 = vmatprep.subr.mxu0 0.0
    %142 = vmatpush1.xpose.msra.mxu0 0.0
    %143 = vmatprep.subr.mxu0 0.0
    %144 = vmatpush1.xpose.msra.mxu0 0.0
    %145 = vmatprep.subr.mxu0 0.0
    %146 = vmatpush1.xpose.msra.mxu0 0.0
    %147 = vmatprep.subr.mxu0 0.0
    %148 = vmatpush1.xpose.msra.mxu0 0.0
    %149 = vmatprep.subr.mxu0 0.0
    %150 = vmatpush1.xpose.msra.mxu0 0.0
    %151 = vmatprep.subr.mxu0 0.0
    %152 = vmatpush1.xpose.msra.mxu0 0.0
    %153 = vmatprep.subr.mxu0 0.0
    %154 = vmatpush1.xpose.msra.mxu0 0.0
    %155 = vmatprep.subr.mxu0 0.0
    %156 = vmatpush1.xpose.msra.mxu0 0.0
    %157 = vmatprep.subr.mxu0 0.0
    %158 = vmatpush1.xpose.msra.mxu0 0.0
    %159 = vmatprep.subr.mxu0 0.0
    %160 = vmatpush1.xpose.msra.mxu0 0.0
    %161 = vmatprep.subr.mxu0 0.0
    %162 = vmatpush1.xpose.msra.mxu0 0.0
    %163 = vmatprep.subr.mxu0 0.0
    %164 = vmatpush1.xpose.msra.mxu0 0.0
    %165 = vmatprep.subr.mxu0 0.0
    %166 = vmatpush1.xpose.msra.mxu0 0.0
    %167 = vmatprep.subr.mxu0 0.0
    %168 = vmatpush1.xpose.msra.mxu0 %v135
    %169 = vmatprep.subr.mxu0 0.0
    %170 = vmatpush2.xpose.msra.mxu0 0.0
    %171 = vmatprep.subr.mxu0 0.0
    %172 = vmatpush2.xpose.msra.mxu0 0.0
    %173 = vmatprep.subr.mxu0 0.0
    %174 = vmatpush2.xpose.msra.mxu0 0.0
    %175 = vmatprep.subr.mxu0 0.0
    %176 = vmatpush2.xpose.msra.mxu0 0.0
    %177 = vmatprep.subr.mxu0 0.0
    %178 = vmatpush2.xpose.msra.mxu0 0.0
    %179 = vmatprep.subr.mxu0 0.0
    %180 = vmatpush2.xpose.msra.mxu0 0.0
    %181 = vmatprep.subr.mxu0 0.0
    %182 = vmatpush2.xpose.msra.mxu0 0.0
    %183 = vmatprep.subr.mxu0 0.0
    %184 = vmatpush2.xpose.msra.mxu0 0.0
    %185 = vmatprep.subr.mxu0 0.0
    %186 = vmatpush2.xpose.msra.mxu0 0.0
    %187 = vmatprep.subr.mxu0 0.0
    %188 = vmatpush2.xpose.msra.mxu0 0.0
    %189 = vmatprep.subr.mxu0 0.0
    %190 = vmatpush2.xpose.msra.mxu0 0.0
    %191 = vmatprep.subr.mxu0 0.0
    %192 = vmatpush2.xpose.msra.mxu0 0.0
    %193 = vmatprep.subr.mxu0 0.0
    %194 = vmatpush2.xpose.msra.mxu0 0.0
    %195 = vmatprep.subr.mxu0 0.0
    %196 = vmatpush2.xpose.msra.mxu0 0.0
    %197 = vmatprep.subr.mxu0 0.0
    %198 = vmatpush2.xpose.msra.mxu0 0.0
    %199 = vmatprep.subr.mxu0 0.0
    %200 = vmatpush2.xpose.msra.mxu0 0.0
    %201 = vmatprep.mubr.f32.mxu0 0.0
    %202 = vmatmul.mubr.f32.gmra.mxu0 %v133
    %v203 = vpop.f32.mrf.mxu0
    %v204 = vadd.f32 0.0, %v203
    %v205 = vpop.f32.mrf.mxu0
    %206 = vdwg.mxu0
    %208 = vrot.lane.b32.xlu0 %v123, 112
    %v209 = vpop.permute.xlu0 %208
    %v211 = vsel %vm131, %v127, 0
    %v213 = vsel %vm131, %v209, 0
    %215 = vmatprep.subr.mxu0 0.0
    %216 = vmatpush1.xpose.msra.mxu0 0.0
    %217 = vmatprep.subr.mxu0 0.0
    %218 = vmatpush1.xpose.msra.mxu0 0.0
    %219 = vmatprep.subr.mxu0 0.0
    %220 = vmatpush1.xpose.msra.mxu0 0.0
    %221 = vmatprep.subr.mxu0 0.0
    %222 = vmatpush1.xpose.msra.mxu0 0.0
    %223 = vmatprep.subr.mxu0 0.0
    %224 = vmatpush1.xpose.msra.mxu0 0.0
    %225 = vmatprep.subr.mxu0 0.0
    %226 = vmatpush1.xpose.msra.mxu0 0.0
    %227 = vmatprep.subr.mxu0 0.0
    %228 = vmatpush1.xpose.msra.mxu0 0.0
    %229 = vmatprep.subr.mxu0 0.0
    %230 = vmatpush1.xpose.msra.mxu0 0.0
    %231 = vmatprep.subr.mxu0 0.0
    %232 = vmatpush1.xpose.msra.mxu0 0.0
    %233 = vmatprep.subr.mxu0 0.0
    %234 = vmatpush1.xpose.msra.mxu0 0.0
    %235 = vmatprep.subr.mxu0 0.0
    %236 = vmatpush1.xpose.msra.mxu0 0.0
    %237 = vmatprep.subr.mxu0 0.0
    %238 = vmatpush1.xpose.msra.mxu0 0.0
    %239 = vmatprep.subr.mxu0 0.0
    %240 = vmatpush1.xpose.msra.mxu0 0.0
    %241 = vmatprep.subr.mxu0 0.0
    %242 = vmatpush1.xpose.msra.mxu0 0.0
    %243 = vmatprep.subr.mxu0 0.0
    %244 = vmatpush1.xpose.msra.mxu0 0.0
    %245 = vmatprep.subr.mxu0 0.0
    %246 = vmatpush1.xpose.msra.mxu0 %v213
    %247 = vmatprep.subr.mxu0 0.0
    %248 = vmatpush2.xpose.msra.mxu0 0.0
    %249 = vmatprep.subr.mxu0 0.0
    %250 = vmatpush2.xpose.msra.mxu0 0.0
    %251 = vmatprep.subr.mxu0 0.0
    %252 = vmatpush2.xpose.msra.mxu0 0.0
    %253 = vmatprep.subr.mxu0 0.0
    %254 = vmatpush2.xpose.msra.mxu0 0.0
    %255 = vmatprep.subr.mxu0 0.0
    %256 = vmatpush2.xpose.msra.mxu0 0.0
    %257 = vmatprep.subr.mxu0 0.0
    %258 = vmatpush2.xpose.msra.mxu0 0.0
    %259 = vmatprep.subr.mxu0 0.0
    %260 = vmatpush2.xpose.msra.mxu0 0.0
    %261 = vmatprep.subr.mxu0 0.0
    %262 = vmatpush2.xpose.msra.mxu0 0.0
    %263 = vmatprep.subr.mxu0 0.0
    %264 = vmatpush2.xpose.msra.mxu0 0.0
    %265 = vmatprep.subr.mxu0 0.0
    %266 = vmatpush2.xpose.msra.mxu0 0.0
    %267 = vmatprep.subr.mxu0 0.0
    %268 = vmatpush2.xpose.msra.mxu0 0.0
    %269 = vmatprep.subr.mxu0 0.0
    %270 = vmatpush2.xpose.msra.mxu0 0.0
    %271 = vmatprep.subr.mxu0 0.0
    %272 = vmatpush2.xpose.msra.mxu0 0.0
    %273 = vmatprep.subr.mxu0 0.0
    %274 = vmatpush2.xpose.msra.mxu0 0.0
    %275 = vmatprep.subr.mxu0 0.0
    %276 = vmatpush2.xpose.msra.mxu0 0.0
    %277 = vmatprep.subr.mxu0 0.0
    %278 = vmatpush2.xpose.msra.mxu0 0.0
    %279 = vmatprep.mubr.f32.mxu0 0.0
    %280 = vmatmul.mubr.f32.gmra.mxu0 %v211
    %v281 = vpop.f32.mrf.mxu0
    %v282 = vadd.f32 0.0, %v281
    %v283 = vpop.f32.mrf.mxu0
    %284 = vdwg.mxu0
    %v285 = vsel %vm131, %v204, -inf
    %286 = vmax.xlane.f32.xlu0 %v285
    %v287 = vpop.xlane.xlu0 %286
    %v288 = vsel %vm131, %v282, -inf
    %289 = vmax.xlane.f32.xlu0 %v288
    %v290 = vpop.xlane.xlu0 %289
    %v291 = vsub.f32 %v204, %v287
    %v292 = vsub.f32 %v282, %v290
    %v293 = vmul.f32 %v291, 1.442695
    %v294 = vpow.pop %v293
    %v295 = vmul.f32 %v292, 1.442695
    %v296 = vpow.pop %v295
    %v297 = vsel %vm131, %v294, 0.0
    %298 = vadd.xlane.f32.xlu0 %v297
    %v299 = vpop.xlane.xlu0 %298
    %v300 = vsel %vm131, %v296, 0.0
    %301 = vadd.xlane.f32.xlu0 %v300
    %v302 = vpop.xlane.xlu0 %301
    %v303 = vrcp.pop %v299
    %v304 = vmul.f32 %v294, %v303
    %v305 = vrcp.pop %v302
    %v306 = vmul.f32 %v296, %v305
    %307 = vrot.lane.b32.xlu0 %v118, 96
    %v308 = vpop.permute.xlu0 %307
    %v311 = vsel %vm131, %v304, 0
    %313 = vmatprep.subr.mxu0 0.0
    %314 = vmatpush1.msra.mxu0 0.0
    %315 = vmatprep.subr.mxu0 0.0
    %316 = vmatpush1.msra.mxu0 0.0
    %317 = vmatprep.subr.mxu0 0.0
    %318 = vmatpush1.msra.mxu0 0.0
    %319 = vmatprep.subr.mxu0 0.0
    %320 = vmatpush1.msra.mxu0 0.0
    %321 = vmatprep.subr.mxu0 0.0
    %322 = vmatpush1.msra.mxu0 0.0
    %323 = vmatprep.subr.mxu0 0.0
    %324 = vmatpush1.msra.mxu0 0.0
    %325 = vmatprep.subr.mxu0 0.0
    %326 = vmatpush1.msra.mxu0 0.0
    %327 = vmatprep.subr.mxu0 0.0
    %328 = vmatpush1.msra.mxu0 0.0
    %329 = vmatprep.subr.mxu0 0.0
    %330 = vmatpush1.msra.mxu0 0.0
    %331 = vmatprep.subr.mxu0 0.0
    %332 = vmatpush1.msra.mxu0 0.0
    %333 = vmatprep.subr.mxu0 0.0
    %334 = vmatpush1.msra.mxu0 0.0
    %335 = vmatprep.subr.mxu0 0.0
    %336 = vmatpush1.msra.mxu0 0.0
    %337 = vmatprep.subr.mxu0 0.0
    %338 = vmatpush1.msra.mxu0 0.0
    %339 = vmatprep.subr.mxu0 0.0
    %340 = vmatpush1.msra.mxu0 0.0
    %341 = vmatprep.subr.mxu0 0.0
    %342 = vmatpush1.msra.mxu0 0.0
    %343 = vmatprep.subr.mxu0 0.0
    %344 = vmatpush1.msra.mxu0 %v308
    %345 = vmatprep.subr.mxu0 0.0
    %346 = vmatpush2.msra.mxu0 0.0
    %347 = vmatprep.subr.mxu0 0.0
    %348 = vmatpush2.msra.mxu0 0.0
    %349 = vmatprep.subr.mxu0 0.0
    %350 = vmatpush2.msra.mxu0 0.0
    %351 = vmatprep.subr.mxu0 0.0
    %352 = vmatpush2.msra.mxu0 0.0
    %353 = vmatprep.subr.mxu0 0.0
    %354 = vmatpush2.msra.mxu0 0.0
    %355 = vmatprep.subr.mxu0 0.0
    %356 = vmatpush2.msra.mxu0 0.0
    %357 = vmatprep.subr.mxu0 0.0
    %358 = vmatpush2.msra.mxu0 0.0
    %359 = vmatprep.subr.mxu0 0.0
    %360 = vmatpush2.msra.mxu0 0.0
    %361 = vmatprep.subr.mxu0 0.0
    %362 = vmatpush2.msra.mxu0 0.0
    %363 = vmatprep.subr.mxu0 0.0
    %364 = vmatpush2.msra.mxu0 0.0
    %365 = vmatprep.subr.mxu0 0.0
    %366 = vmatpush2.msra.mxu0 0.0
    %367 = vmatprep.subr.mxu0 0.0
    %368 = vmatpush2.msra.mxu0 0.0
    %369 = vmatprep.subr.mxu0 0.0
    %370 = vmatpush2.msra.mxu0 0.0
    %371 = vmatprep.subr.mxu0 0.0
    %372 = vmatpush2.msra.mxu0 0.0
    %373 = vmatprep.subr.mxu0 0.0
    %374 = vmatpush2.msra.mxu0 0.0
    %375 = vmatprep.subr.mxu0 0.0
    %376 = vmatpush2.msra.mxu0 0.0
    %377 = vmatprep.mubr.f32.mxu0 0.0
    %378 = vmatmul.mubr.f32.gmra.mxu0 %v311
    %v379 = vpop.f32.mrf.mxu0
    %v380 = vadd.f32 0.0, %v379
    %v381 = vpop.f32.mrf.mxu0
    %382 = vdwg.mxu0
    %383 = vrot.lane.b32.xlu0 %v123, 96
    %v384 = vpop.permute.xlu0 %383
    %v387 = vsel %vm131, %v306, 0
    %389 = vmatprep.subr.mxu0 0.0
    %390 = vmatpush1.msra.mxu0 0.0
    %391 = vmatprep.subr.mxu0 0.0
    %392 = vmatpush1.msra.mxu0 0.0
    %393 = vmatprep.subr.mxu0 0.0
    %394 = vmatpush1.msra.mxu0 0.0
    %395 = vmatprep.subr.mxu0 0.0
    %396 = vmatpush1.msra.mxu0 0.0
    %397 = vmatprep.subr.mxu0 0.0
    %398 = vmatpush1.msra.mxu0 0.0
    %399 = vmatprep.subr.mxu0 0.0
    %400 = vmatpush1.msra.mxu0 0.0
    %401 = vmatprep.subr.mxu0 0.0
    %402 = vmatpush1.msra.mxu0 0.0
    %403 = vmatprep.subr.mxu0 0.0
    %404 = vmatpush1.msra.mxu0 0.0
    %405 = vmatprep.subr.mxu0 0.0
    %406 = vmatpush1.msra.mxu0 0.0
    %407 = vmatprep.subr.mxu0 0.0
    %408 = vmatpush1.msra.mxu0 0.0
    %409 = vmatprep.subr.mxu0 0.0
    %410 = vmatpush1.msra.mxu0 0.0
    %411 = vmatprep.subr.mxu0 0.0
    %412 = vmatpush1.msra.mxu0 0.0
    %413 = vmatprep.subr.mxu0 0.0
    %414 = vmatpush1.msra.mxu0 0.0
    %415 = vmatprep.subr.mxu0 0.0
    %416 = vmatpush1.msra.mxu0 0.0
    %417 = vmatprep.subr.mxu0 0.0
    %418 = vmatpush1.msra.mxu0 0.0
    %419 = vmatprep.subr.mxu0 0.0
    %420 = vmatpush1.msra.mxu0 %v384
    %421 = vmatprep.subr.mxu0 0.0
    %422 = vmatpush2.msra.mxu0 0.0
    %423 = vmatprep.subr.mxu0 0.0
    %424 = vmatpush2.msra.mxu0 0.0
    %425 = vmatprep.subr.mxu0 0.0
    %426 = vmatpush2.msra.mxu0 0.0
    %427 = vmatprep.subr.mxu0 0.0
    %428 = vmatpush2.msra.mxu0 0.0
    %429 = vmatprep.subr.mxu0 0.0
    %430 = vmatpush2.msra.mxu0 0.0
    %431 = vmatprep.subr.mxu0 0.0
    %432 = vmatpush2.msra.mxu0 0.0
    %433 = vmatprep.subr.mxu0 0.0
    %434 = vmatpush2.msra.mxu0 0.0
    %435 = vmatprep.subr.mxu0 0.0
    %436 = vmatpush2.msra.mxu0 0.0
    %437 = vmatprep.subr.mxu0 0.0
    %438 = vmatpush2.msra.mxu0 0.0
    %439 = vmatprep.subr.mxu0 0.0
    %440 = vmatpush2.msra.mxu0 0.0
    %441 = vmatprep.subr.mxu0 0.0
    %442 = vmatpush2.msra.mxu0 0.0
    %443 = vmatprep.subr.mxu0 0.0
    %444 = vmatpush2.msra.mxu0 0.0
    %445 = vmatprep.subr.mxu0 0.0
    %446 = vmatpush2.msra.mxu0 0.0
    %447 = vmatprep.subr.mxu0 0.0
    %448 = vmatpush2.msra.mxu0 0.0
    %449 = vmatprep.subr.mxu0 0.0
    %450 = vmatpush2.msra.mxu0 0.0
    %451 = vmatprep.subr.mxu0 0.0
    %452 = vmatpush2.msra.mxu0 0.0
    %453 = vmatprep.mubr.f32.mxu0 0.0
    %454 = vmatmul.mubr.f32.gmra.mxu0 %v387
    %v455 = vpop.f32.mrf.mxu0
    %v456 = vadd.f32 0.0, %v455
    %v457 = vpop.f32.mrf.mxu0
    %458 = vdwg.mxu0
    %459 = vrot.lane.b32.xlu0 %v126, 120
    %v460 = vpop.permute.xlu0 %459
    %461 = vrot.lane.b32.xlu0 %v118, 104
    %v462 = vpop.permute.xlu0 %461
    %v463 = vsel %vm131, %v460, 0
    %v465 = vsel %vm131, %v462, 0
    %467 = vmatprep.subr.mxu0 0.0
    %468 = vmatpush1.xpose.msra.mxu0 0.0
    %469 = vmatprep.subr.mxu0 0.0
    %470 = vmatpush1.xpose.msra.mxu0 0.0
    %471 = vmatprep.subr.mxu0 0.0
    %472 = vmatpush1.xpose.msra.mxu0 0.0
    %473 = vmatprep.subr.mxu0 0.0
    %474 = vmatpush1.xpose.msra.mxu0 0.0
    %475 = vmatprep.subr.mxu0 0.0
    %476 = vmatpush1.xpose.msra.mxu0 0.0
    %477 = vmatprep.subr.mxu0 0.0
    %478 = vmatpush1.xpose.msra.mxu0 0.0
    %479 = vmatprep.subr.mxu0 0.0
    %480 = vmatpush1.xpose.msra.mxu0 0.0
    %481 = vmatprep.subr.mxu0 0.0
    %482 = vmatpush1.xpose.msra.mxu0 0.0
    %483 = vmatprep.subr.mxu0 0.0
    %484 = vmatpush1.xpose.msra.mxu0 0.0
    %485 = vmatprep.subr.mxu0 0.0
    %486 = vmatpush1.xpose.msra.mxu0 0.0
    %487 = vmatprep.subr.mxu0 0.0
    %488 = vmatpush1.xpose.msra.mxu0 0.0
    %489 = vmatprep.subr.mxu0 0.0
    %490 = vmatpush1.xpose.msra.mxu0 0.0
    %491 = vmatprep.subr.mxu0 0.0
    %492 = vmatpush1.xpose.msra.mxu0 0.0
    %493 = vmatprep.subr.mxu0 0.0
    %494 = vmatpush1.xpose.msra.mxu0 0.0
    %495 = vmatprep.subr.mxu0 0.0
    %496 = vmatpush1.xpose.msra.mxu0 0.0
    %497 = vmatprep.subr.mxu0 0.0
    %498 = vmatpush1.xpose.msra.mxu0 %v465
    %499 = vmatprep.subr.mxu0 0.0
    %500 = vmatpush2.xpose.msra.mxu0 0.0
    %501 = vmatprep.subr.mxu0 0.0
    %502 = vmatpush2.xpose.msra.mxu0 0.0
    %503 = vmatprep.subr.mxu0 0.0
    %504 = vmatpush2.xpose.msra.mxu0 0.0
    %505 = vmatprep.subr.mxu0 0.0
    %506 = vmatpush2.xpose.msra.mxu0 0.0
    %507 = vmatprep.subr.mxu0 0.0
    %508 = vmatpush2.xpose.msra.mxu0 0.0
    %509 = vmatprep.subr.mxu0 0.0
    %510 = vmatpush2.xpose.msra.mxu0 0.0
    %511 = vmatprep.subr.mxu0 0.0
    %512 = vmatpush2.xpose.msra.mxu0 0.0
    %513 = vmatprep.subr.mxu0 0.0
    %514 = vmatpush2.xpose.msra.mxu0 0.0
    %515 = vmatprep.subr.mxu0 0.0
    %516 = vmatpush2.xpose.msra.mxu0 0.0
    %517 = vmatprep.subr.mxu0 0.0
    %518 = vmatpush2.xpose.msra.mxu0 0.0
    %519 = vmatprep.subr.mxu0 0.0
    %520 = vmatpush2.xpose.msra.mxu0 0.0
    %521 = vmatprep.subr.mxu0 0.0
    %522 = vmatpush2.xpose.msra.mxu0 0.0
    %523 = vmatprep.subr.mxu0 0.0
    %524 = vmatpush2.xpose.msra.mxu0 0.0
    %525 = vmatprep.subr.mxu0 0.0
    %526 = vmatpush2.xpose.msra.mxu0 0.0
    %527 = vmatprep.subr.mxu0 0.0
    %528 = vmatpush2.xpose.msra.mxu0 0.0
    %529 = vmatprep.subr.mxu0 0.0
    %530 = vmatpush2.xpose.msra.mxu0 0.0
    %531 = vmatprep.mubr.f32.mxu0 0.0
    %532 = vmatmul.mubr.f32.gmra.mxu0 %v463
    %v533 = vpop.f32.mrf.mxu0
    %v534 = vadd.f32 0.0, %v533
    %v535 = vpop.f32.mrf.mxu0
    %536 = vdwg.mxu0
    %537 = vrot.lane.b32.xlu0 %v127, 120
    %v538 = vpop.permute.xlu0 %537
    %539 = vrot.lane.b32.xlu0 %v123, 104
    %v540 = vpop.permute.xlu0 %539
    %v541 = vsel %vm131, %v538, 0
    %v543 = vsel %vm131, %v540, 0
    %545 = vmatprep.subr.mxu0 0.0
    %546 = vmatpush1.xpose.msra.mxu0 0.0
    %547 = vmatprep.subr.mxu0 0.0
    %548 = vmatpush1.xpose.msra.mxu0 0.0
    %549 = vmatprep.subr.mxu0 0.0
    %550 = vmatpush1.xpose.msra.mxu0 0.0
    %551 = vmatprep.subr.mxu0 0.0
    %552 = vmatpush1.xpose.msra.mxu0 0.0
    %553 = vmatprep.subr.mxu0 0.0
    %554 = vmatpush1.xpose.msra.mxu0 0.0
    %555 = vmatprep.subr.mxu0 0.0
    %556 = vmatpush1.xpose.msra.mxu0 0.0
    %557 = vmatprep.subr.mxu0 0.0
    %558 = vmatpush1.xpose.msra.mxu0 0.0
    %559 = vmatprep.subr.mxu0 0.0
    %560 = vmatpush1.xpose.msra.mxu0 0.0
    %561 = vmatprep.subr.mxu0 0.0
    %562 = vmatpush1.xpose.msra.mxu0 0.0
    %563 = vmatprep.subr.mxu0 0.0
    %564 = vmatpush1.xpose.msra.mxu0 0.0
    %565 = vmatprep.subr.mxu0 0.0
    %566 = vmatpush1.xpose.msra.mxu0 0.0
    %567 = vmatprep.subr.mxu0 0.0
    %568 = vmatpush1.xpose.msra.mxu0 0.0
    %569 = vmatprep.subr.mxu0 0.0
    %570 = vmatpush1.xpose.msra.mxu0 0.0
    %571 = vmatprep.subr.mxu0 0.0
    %572 = vmatpush1.xpose.msra.mxu0 0.0
    %573 = vmatprep.subr.mxu0 0.0
    %574 = vmatpush1.xpose.msra.mxu0 0.0
    %575 = vmatprep.subr.mxu0 0.0
    %576 = vmatpush1.xpose.msra.mxu0 %v543
    %577 = vmatprep.subr.mxu0 0.0
    %578 = vmatpush2.xpose.msra.mxu0 0.0
    %579 = vmatprep.subr.mxu0 0.0
    %580 = vmatpush2.xpose.msra.mxu0 0.0
    %581 = vmatprep.subr.mxu0 0.0
    %582 = vmatpush2.xpose.msra.mxu0 0.0
    %583 = vmatprep.subr.mxu0 0.0
    %584 = vmatpush2.xpose.msra.mxu0 0.0
    %585 = vmatprep.subr.mxu0 0.0
    %586 = vmatpush2.xpose.msra.mxu0 0.0
    %587 = vmatprep.subr.mxu0 0.0
    %588 = vmatpush2.xpose.msra.mxu0 0.0
    %589 = vmatprep.subr.mxu0 0.0
    %590 = vmatpush2.xpose.msra.mxu0 0.0
    %591 = vmatprep.subr.mxu0 0.0
    %592 = vmatpush2.xpose.msra.mxu0 0.0
    %593 = vmatprep.subr.mxu0 0.0
    %594 = vmatpush2.xpose.msra.mxu0 0.0
    %595 = vmatprep.subr.mxu0 0.0
    %596 = vmatpush2.xpose.msra.mxu0 0.0
    %597 = vmatprep.subr.mxu0 0.0
    %598 = vmatpush2.xpose.msra.mxu0 0.0
    %599 = vmatprep.subr.mxu0 0.0
    %600 = vmatpush2.xpose.msra.mxu0 0.0
    %601 = vmatprep.subr.mxu0 0.0
    %602 = vmatpush2.xpose.msra.mxu0 0.0
    %603 = vmatprep.subr.mxu0 0.0
    %604 = vmatpush2.xpose.msra.mxu0 0.0
    %605 = vmatprep.subr.mxu0 0.0
    %606 = vmatpush2.xpose.msra.mxu0 0.0
    %607 = vmatprep.subr.mxu0 0.0
    %608 = vmatpush2.xpose.msra.mxu0 0.0
    %609 = vmatprep.mubr.f32.mxu0 0.0
    %610 = vmatmul.mubr.f32.gmra.mxu0 %v541
    %v611 = vpop.f32.mrf.mxu0
    %v612 = vadd.f32 0.0, %v611
    %v613 = vpop.f32.mrf.mxu0
    %614 = vdwg.mxu0
    %v615 = vsel %vm131, %v534, -inf
    %616 = vmax.xlane.f32.xlu0 %v615
    %v617 = vpop.xlane.xlu0 %616
    %v618 = vsel %vm131, %v612, -inf
    %619 = vmax.xlane.f32.xlu0 %v618
    %v620 = vpop.xlane.xlu0 %619
    %v621 = vsub.f32 %v534, %v617
    %v622 = vsub.f32 %v612, %v620
    %v623 = vmul.f32 %v621, 1.442695
    %v624 = vpow.pop %v623
    %v625 = vmul.f32 %v622, 1.442695
    %v626 = vpow.pop %v625
    %v627 = vsel %vm131, %v624, 0.0
    %628 = vadd.xlane.f32.xlu0 %v627
    %v629 = vpop.xlane.xlu0 %628
    %v630 = vsel %vm131, %v626, 0.0
    %631 = vadd.xlane.f32.xlu0 %v630
    %v632 = vpop.xlane.xlu0 %631
    %v633 = vrcp.pop %v629
    %v634 = vmul.f32 %v624, %v633
    %v635 = vrcp.pop %v632
    %v636 = vmul.f32 %v626, %v635
    %637 = vrot.lane.b32.xlu0 %v118, 88
    %v638 = vpop.permute.xlu0 %637
    %v641 = vsel %vm131, %v634, 0
    %643 = vmatprep.subr.mxu0 0.0
    %644 = vmatpush1.msra.mxu0 0.0
    %645 = vmatprep.subr.mxu0 0.0
    %646 = vmatpush1.msra.mxu0 0.0
    %647 = vmatprep.subr.mxu0 0.0
    %648 = vmatpush1.msra.mxu0 0.0
    %649 = vmatprep.subr.mxu0 0.0
    %650 = vmatpush1.msra.mxu0 0.0
    %651 = vmatprep.subr.mxu0 0.0
    %652 = vmatpush1.msra.mxu0 0.0
    %653 = vmatprep.subr.mxu0 0.0
    %654 = vmatpush1.msra.mxu0 0.0
    %655 = vmatprep.subr.mxu0 0.0
    %656 = vmatpush1.msra.mxu0 0.0
    %657 = vmatprep.subr.mxu0 0.0
    %658 = vmatpush1.msra.mxu0 0.0
    %659 = vmatprep.subr.mxu0 0.0
    %660 = vmatpush1.msra.mxu0 0.0
    %661 = vmatprep.subr.mxu0 0.0
    %662 = vmatpush1.msra.mxu0 0.0
    %663 = vmatprep.subr.mxu0 0.0
    %664 = vmatpush1.msra.mxu0 0.0
    %665 = vmatprep.subr.mxu0 0.0
    %666 = vmatpush1.msra.mxu0 0.0
    %667 = vmatprep.subr.mxu0 0.0
    %668 = vmatpush1.msra.mxu0 0.0
    %669 = vmatprep.subr.mxu0 0.0
    %670 = vmatpush1.msra.mxu0 0.0
    %671 = vmatprep.subr.mxu0 0.0
    %672 = vmatpush1.msra.mxu0 0.0
    %673 = vmatprep.subr.mxu0 0.0
    %674 = vmatpush1.msra.mxu0 %v638
    %675 = vmatprep.subr.mxu0 0.0
    %676 = vmatpush2.msra.mxu0 0.0
    %677 = vmatprep.subr.mxu0 0.0
    %678 = vmatpush2.msra.mxu0 0.0
    %679 = vmatprep.subr.mxu0 0.0
    %680 = vmatpush2.msra.mxu0 0.0
    %681 = vmatprep.subr.mxu0 0.0
    %682 = vmatpush2.msra.mxu0 0.0
    %683 = vmatprep.subr.mxu0 0.0
    %684 = vmatpush2.msra.mxu0 0.0
    %685 = vmatprep.subr.mxu0 0.0
    %686 = vmatpush2.msra.mxu0 0.0
    %687 = vmatprep.subr.mxu0 0.0
    %688 = vmatpush2.msra.mxu0 0.0
    %689 = vmatprep.subr.mxu0 0.0
    %690 = vmatpush2.msra.mxu0 0.0
    %691 = vmatprep.subr.mxu0 0.0
    %692 = vmatpush2.msra.mxu0 0.0
    %693 = vmatprep.subr.mxu0 0.0
    %694 = vmatpush2.msra.mxu0 0.0
    %695 = vmatprep.subr.mxu0 0.0
    %696 = vmatpush2.msra.mxu0 0.0
    %697 = vmatprep.subr.mxu0 0.0
    %698 = vmatpush2.msra.mxu0 0.0
    %699 = vmatprep.subr.mxu0 0.0
    %700 = vmatpush2.msra.mxu0 0.0
    %701 = vmatprep.subr.mxu0 0.0
    %702 = vmatpush2.msra.mxu0 0.0
    %703 = vmatprep.subr.mxu0 0.0
    %704 = vmatpush2.msra.mxu0 0.0
    %705 = vmatprep.subr.mxu0 0.0
    %706 = vmatpush2.msra.mxu0 0.0
    %707 = vmatprep.mubr.f32.mxu0 0.0
    %708 = vmatmul.mubr.f32.gmra.mxu0 %v641
    %v709 = vpop.f32.mrf.mxu0
    %v710 = vadd.f32 0.0, %v709
    %v711 = vpop.f32.mrf.mxu0
    %712 = vdwg.mxu0
    %713 = vrot.lane.b32.xlu0 %v123, 88
    %v714 = vpop.permute.xlu0 %713
    %v717 = vsel %vm131, %v636, 0
    %719 = vmatprep.subr.mxu0 0.0
    %720 = vmatpush1.msra.mxu0 0.0
    %721 = vmatprep.subr.mxu0 0.0
    %722 = vmatpush1.msra.mxu0 0.0
    %723 = vmatprep.subr.mxu0 0.0
    %724 = vmatpush1.msra.mxu0 0.0
    %725 = vmatprep.subr.mxu0 0.0
    %726 = vmatpush1.msra.mxu0 0.0
    %727 = vmatprep.subr.mxu0 0.0
    %728 = vmatpush1.msra.mxu0 0.0
    %729 = vmatprep.subr.mxu0 0.0
    %730 = vmatpush1.msra.mxu0 0.0
    %731 = vmatprep.subr.mxu0 0.0
    %732 = vmatpush1.msra.mxu0 0.0
    %733 = vmatprep.subr.mxu0 0.0
    %734 = vmatpush1.msra.mxu0 0.0
    %735 = vmatprep.subr.mxu0 0.0
    %736 = vmatpush1.msra.mxu0 0.0
    %737 = vmatprep.subr.mxu0 0.0
    %738 = vmatpush1.msra.mxu0 0.0
    %739 = vmatprep.subr.mxu0 0.0
    %740 = vmatpush1.msra.mxu0 0.0
    %741 = vmatprep.subr.mxu0 0.0
    %742 = vmatpush1.msra.mxu0 0.0
    %743 = vmatprep.subr.mxu0 0.0
    %744 = vmatpush1.msra.mxu0 0.0
    %745 = vmatprep.subr.mxu0 0.0
    %746 = vmatpush1.msra.mxu0 0.0
    %747 = vmatprep.subr.mxu0 0.0
    %748 = vmatpush1.msra.mxu0 0.0
    %749 = vmatprep.subr.mxu0 0.0
    %750 = vmatpush1.msra.mxu0 %v714
    %751 = vmatprep.subr.mxu0 0.0
    %752 = vmatpush2.msra.mxu0 0.0
    %753 = vmatprep.subr.mxu0 0.0
    %754 = vmatpush2.msra.mxu0 0.0
    %755 = vmatprep.subr.mxu0 0.0
    %756 = vmatpush2.msra.mxu0 0.0
    %757 = vmatprep.subr.mxu0 0.0
    %758 = vmatpush2.msra.mxu0 0.0
    %759 = vmatprep.subr.mxu0 0.0
    %760 = vmatpush2.msra.mxu0 0.0
    %761 = vmatprep.subr.mxu0 0.0
    %762 = vmatpush2.msra.mxu0 0.0
    %763 = vmatprep.subr.mxu0 0.0
    %764 = vmatpush2.msra.mxu0 0.0
    %765 = vmatprep.subr.mxu0 0.0
    %766 = vmatpush2.msra.mxu0 0.0
    %767 = vmatprep.subr.mxu0 0.0
    %768 = vmatpush2.msra.mxu0 0.0
    %769 = vmatprep.subr.mxu0 0.0
    %770 = vmatpush2.msra.mxu0 0.0
    %771 = vmatprep.subr.mxu0 0.0
    %772 = vmatpush2.msra.mxu0 0.0
    %773 = vmatprep.subr.mxu0 0.0
    %774 = vmatpush2.msra.mxu0 0.0
    %775 = vmatprep.subr.mxu0 0.0
    %776 = vmatpush2.msra.mxu0 0.0
    %777 = vmatprep.subr.mxu0 0.0
    %778 = vmatpush2.msra.mxu0 0.0
    %779 = vmatprep.subr.mxu0 0.0
    %780 = vmatpush2.msra.mxu0 0.0
    %781 = vmatprep.subr.mxu0 0.0
    %782 = vmatpush2.msra.mxu0 0.0
    %783 = vmatprep.mubr.f32.mxu0 0.0
    %784 = vmatmul.mubr.f32.gmra.mxu0 %v717
    %v785 = vpop.f32.mrf.mxu0
    %v786 = vadd.f32 0.0, %v785
    %v787 = vpop.f32.mrf.mxu0
    %788 = vdwg.mxu0
    %791 = vrot.lane.b32.xlu0 %v710, 8
    %v792 = vpop.permute.xlu0 %791
    %793 = vrot.lane.b32.xlu0 %v786, 8
    %v794 = vpop.permute.xlu0 %793
    %v797 = vsel %vm131, %v380, %v792
    %v798 = vsel %vm131, %v456, %v794
    %799 = vrot.lane.b32.xlu0 %v118, 80
    %v800 = vpop.permute.xlu0 %799
    %801 = vrot.lane.b32.xlu0 %v123, 80
    %v802 = vpop.permute.xlu0 %801
    %v805 = vadd.f32 %v797, %v800
    %v806 = vadd.f32 %v798, %v802
    %v807 = vmax.f32 %v805, 0.0
    %v808 = vmax.f32 %v806, 0.0
    %809 = vst.msk [vmem:[#allocation7] sm:$0xff] %vm44, %v807
    %810 = vst.msk [vmem:[#allocation7 + $0x8] sm:$0xff] %vm44, %v808
    // Predicated region
    $region18: #{tpu_custom_call.1} parent=1 // pred_check
      _
    $region19: #{tpu_custom_call.1} parent=1 // pred_check_branch
      %812 = sbr.rel (0) target = $region21
    $region20: #{tpu_custom_call.1} parent=1 // pred_region
      %s814 = ssub.s32 256, 256
      %815 = vsyncadd [#allocation4], %s814
      %s816 = sshll.u32 [#allocation7], 4
      %s817 = int_to_ptr.vmem [resolvable:$true] %s816
      %822 = dma.vmem_to_hbm [thread:$0]  %s817, 256, %s2, [#allocation4], 128, 128, 8
    $region21: #{tpu_custom_call.1} parent=1 // pred_fallthru
      _
    // Predicated region
    $region22: #{tpu_custom_call.1} parent=1 // pred_check
      _
    $region23: #{tpu_custom_call.1} parent=1 // pred_check_branch
      %824 = sbr.rel (0) target = $region25
    $region24: #{tpu_custom_call.1} parent=1 // pred_region
      %825 = dma.done [#allocation4], 256
    $region25: #{tpu_custom_call.1} parent=1 // pred_fallthru
      _
    %826 = vsyncpa [#allocation3], 1
    %827 = vsyncpa [#allocation6], 1
    %828 = vsyncpa [#allocation4], 1

</llo_original>
